<compile_context>
chip_gen: v6e
topology: v6e:2x2x1
jax: 0.10.0
libtpu: 0.0.40
codegen_flags: <defaults>
</compile_context>

<pallas_src>
import functools

import jax
import jax.numpy as jnp
from jax.experimental import pallas as pl
from jax.experimental.pallas import tpu as pltpu


def _round_up(n: int, m: int) -> int:
    return ((n + m - 1) // m) * m


def _ffn_kernel(x_ref, w1_ref, b1_ref, w2_ref, b2_ref, o_ref, acc_ref):
    """One (row_tile, h_tile) step of o = GELU(x @ W1 + b1) @ W2 + b2.

    x_ref  : (block_rows, Dp)  compute dtype (bf16)
    w1_ref : (Dp, block_h)     compute dtype
    b1_ref : (1, block_h)      f32
    w2_ref : (block_h, Dp)     compute dtype
    b2_ref : (1, Dp)           f32
    o_ref  : (block_rows, Dp)  output dtype
    acc_ref: (block_rows, Dp)  f32 scratch accumulator (resident over h axis)
    """
    h_idx = pl.program_id(1)

    # Fold the output bias into the accumulator init (no per-step broadcast add).
    @pl.when(h_idx == 0)
    def _():
        acc_ref[...] = jnp.broadcast_to(b2_ref[...], acc_ref.shape)

    # First projection for this hidden tile (MXU, f32 accumulation).
    h = jnp.dot(x_ref[...], w1_ref[...], preferred_element_type=jnp.float32)
    h = h + b1_ref[...]  # (1, block_h) broadcasts over rows

    # GELU (tanh approximation) in f32 — EUP handles tanh; keeps v5e happy too.
    c = jnp.float32(0.7978845608028654)  # sqrt(2/pi)
    h = 0.5 * h * (1.0 + jnp.tanh(c * (h + 0.044715 * h * h * h)))

    # Partial second projection back to embedding dim, accumulated in f32.
    acc_ref[...] += jnp.dot(h.astype(w2_ref.dtype), w2_ref[...],
                            preferred_element_type=jnp.float32)

    @pl.when(h_idx == pl.num_programs(1) - 1)
    def _():
        o_ref[...] = acc_ref[...].astype(o_ref.dtype)


@functools.partial(jax.jit,
                   static_argnames=("block_rows", "block_h", "compute_dtype"))
def quantum_feedforward(x, w1, b1, w2, b2, *,
                        block_rows=256, block_h=512,
                        compute_dtype=jnp.bfloat16):
    """x: (B, S, D) float32. Returns (B, S, D) float32."""
    B, S, D = x.shape
    H = w1.shape[1]
    rows = B * S

    # ----- pad to lane/sublane-friendly, tile-divisible shapes ----------------
    Dp = _round_up(max(D, 128), 128)                      # lane-dense output
    # Clamp tile sizes to the (padded) problem size; keep them 8/128-aligned.
    block_rows = max(8, min(block_rows, _round_up(rows, 8)))
    block_rows = _round_up(block_rows, 8)
    block_h = max(128, min(block_h, _round_up(H, 128)))
    block_h = (block_h // 128) * 128
    Hp = _round_up(H, block_h)
    rows_p = _round_up(rows, block_rows)

    x2d = x.reshape(rows, D)
    x2d = jnp.pad(x2d, ((0, rows_p - rows), (0, Dp - D))).astype(compute_dtype)
    w1p = jnp.pad(w1, ((0, Dp - D), (0, Hp - H))).astype(compute_dtype)
    w2p = jnp.pad(w2, ((0, Hp - H), (0, Dp - D))).astype(compute_dtype)
    b1p = jnp.pad(b1, (0, Hp - H)).reshape(1, Hp).astype(jnp.float32)
    b2p = jnp.pad(b2, (0, Dp - D)).reshape(1, Dp).astype(jnp.float32)

    grid = (rows_p // block_rows, Hp // block_h)

    out2d = pl.pallas_call(
        _ffn_kernel,
        out_shape=jax.ShapeDtypeStruct((rows_p, Dp), x.dtype),
        grid_spec=pltpu.PrefetchScalarGridSpec(
            num_scalar_prefetch=0,
            grid=grid,
            in_specs=[
                pl.BlockSpec((block_rows, Dp), lambda i, j: (i, 0)),  # x tile
                pl.BlockSpec((Dp, block_h), lambda i, j: (0, j)),     # W1 tile
                pl.BlockSpec((1, block_h), lambda i, j: (0, j)),      # b1 tile
                pl.BlockSpec((block_h, Dp), lambda i, j: (j, 0)),     # W2 tile
                pl.BlockSpec((1, Dp), lambda i, j: (0, 0)),           # b2
            ],
            out_specs=pl.BlockSpec((block_rows, Dp), lambda i, j: (i, 0)),
            scratch_shapes=[pltpu.VMEM((block_rows, Dp), jnp.float32)],
        ),
        compiler_params=pltpu.CompilerParams(
            dimension_semantics=("parallel", "arbitrary"),
            vmem_limit_bytes=48 * 1024 * 1024,  # fits v7x's 64 MiB/TC VMEM
        ),
    )(x2d, w1p, b1p, w2p, b2p)

    return out2d[:rows, :D].reshape(B, S, D)


def init_params(key, embedding_dim):
    """Deterministic synthetic parameters (no checkpoint loading)."""
    hidden_dim = 4 * embedding_dim
    k1, k2 = jax.random.split(key, 2)
    scale1 = 1.0 / jnp.sqrt(jnp.float32(embedding_dim))
    scale2 = 1.0 / jnp.sqrt(jnp.float32(hidden_dim))
    w1 = jax.random.normal(k1, (embedding_dim, hidden_dim), jnp.float32) * scale1
    b1 = jnp.zeros((hidden_dim,), jnp.float32)
    w2 = jax.random.normal(k2, (hidden_dim, embedding_dim), jnp.float32) * scale2
    b2 = jnp.zeros((embedding_dim,), jnp.float32)
    return w1, b1, w2, b2


def _reference_ffn(x, w1, b1, w2, b2, compute_dtype=jnp.bfloat16):
    """Pure-JAX reference with the same bf16-in / f32-accumulate recipe."""
    B, S, D = x.shape
    x2d = x.reshape(-1, D).astype(compute_dtype)
    h = jnp.dot(x2d, w1.astype(compute_dtype),
                preferred_element_type=jnp.float32) + b1
    c = 0.7978845608028654
    h = 0.5 * h * (1.0 + jnp.tanh(c * (h + 0.044715 * h ** 3)))
    y = jnp.dot(h.astype(compute_dtype), w2.astype(compute_dtype),
                preferred_element_type=jnp.float32) + b2
    return y.reshape(B, S, D).astype(x.dtype)


if __name__ == "__main__":
    key = jax.random.PRNGKey(0)
    kx, kp = jax.random.split(key)

    batch, seq, embedding_dim = 2, 8, 32
    x = jax.random.normal(kx, (batch, seq, embedding_dim), jnp.float32)
    w1, b1, w2, b2 = init_params(kp, embedding_dim)

    out = quantum_feedforward(x, w1, b1, w2, b2)
    out = jax.block_until_ready(out)

    ref = _reference_ffn(x, w1, b1, w2, b2)
    assert out.shape == (batch, seq, embedding_dim)
    assert jnp.allclose(out, ref, atol=1e-2, rtol=1e-2), (
        float(jnp.max(jnp.abs(out - ref))))

    print("KERNEL_OK")
</pallas_src>

<mosaic_0001>
module attributes {stable_mosaic.version = 11 : i64} {
  func.func @_ffn_kernel(%arg0: i32, %arg1: i32, %arg2: memref<16x128xbf16, #tpu.memory_space<vmem>>, %arg3: memref<128x128xbf16, #tpu.memory_space<vmem>>, %arg4: memref<1x128xf32, #tpu.memory_space<vmem>>, %arg5: memref<128x128xbf16, #tpu.memory_space<vmem>>, %arg6: memref<1x128xf32, #tpu.memory_space<vmem>>, %arg7: memref<16x128xf32, #tpu.memory_space<vmem>>, %arg8: memref<16x128xf32, #tpu.memory_space<vmem>>) attributes {dimension_semantics = [#tpu.dimension_semantics<parallel>, #tpu.dimension_semantics<arbitrary>], iteration_bounds = array<i64: 1, 1>, scalar_prefetch = 0 : i64, scratch_operands = 1 : i64, tpu.core_type = #tpu.core_type<tc>, window_params = [{transform_indices = @transform_0, window_bounds = array<i64: 16, 128>}, {transform_indices = @transform_1, window_bounds = array<i64: 128, 128>}, {transform_indices = @transform_2, window_bounds = array<i64: 1, 128>}, {transform_indices = @transform_3, window_bounds = array<i64: 128, 128>}, {pipeline_mode = #tpu.pipeline_mode<synchronous>, transform_indices = @transform_4, window_bounds = array<i64: 1, 128>}, {transform_indices = @transform_5, window_bounds = array<i64: 16, 128>}]} {
    %c0_i32 = arith.constant 0 : i32
    %0 = arith.cmpi eq, %arg1, %c0_i32 : i32
    %1 = arith.extui %0 : i1 to i32
    %c0_i32_0 = arith.constant 0 : i32
    %2 = arith.cmpi ne, %1, %c0_i32_0 : i32
    scf.if %2 {
      %c0_19 = arith.constant 0 : index
      %c0_20 = arith.constant 0 : index
      %31 = vector.load %arg6[%c0_19, %c0_20] : memref<1x128xf32, #tpu.memory_space<vmem>>, vector<1x128xf32>
      %32 = vector.shape_cast %31 : vector<1x128xf32> to vector<1x128xf32>
      %33 = vector.broadcast %32 : vector<1x128xf32> to vector<16x128xf32>
      %c0_21 = arith.constant 0 : index
      %c0_22 = arith.constant 0 : index
      %34 = vector.load %arg8[%c0_21, %c0_22] : memref<16x128xf32, #tpu.memory_space<vmem>>, vector<16x128xf32>
      tpu.vector_store %arg8[%c0_21, %c0_22], %33 {strides = array<i32>} : memref<16x128xf32, #tpu.memory_space<vmem>>, vector<16x128xf32>,
    } else {
    }
    %c0 = arith.constant 0 : index
    %c0_1 = arith.constant 0 : index
    %3 = vector.load %arg2[%c0, %c0_1] : memref<16x128xbf16, #tpu.memory_space<vmem>>, vector<16x128xbf16>
    %c0_2 = arith.constant 0 : index
    %c0_3 = arith.constant 0 : index
    %4 = vector.load %arg3[%c0_2, %c0_3] : memref<128x128xbf16, #tpu.memory_space<vmem>>, vector<128x128xbf16>
    %cst = arith.constant dense<0.000000e+00> : vector<16x128xf32>
    %5 = tpu.matmul %3, %4, %cst {dimension_numbers = #tpu.dot_dimension_numbers<[1], [0], [0], [1], [0, 0, 1, 1], [], []>} : vector<16x128xbf16>, vector<128x128xbf16>, vector<16x128xf32> -> vector<16x128xf32>
    %c0_4 = arith.constant 0 : index
    %c0_5 = arith.constant 0 : index
    %6 = vector.load %arg4[%c0_4, %c0_5] : memref<1x128xf32, #tpu.memory_space<vmem>>, vector<1x128xf32>
    %7 = vector.broadcast %6 : vector<1x128xf32> to vector<16x128xf32>
    %8 = arith.addf %5, %7 : vector<16x128xf32>
    %cst_6 = arith.constant 5.000000e-01 : f32
    %9 = vector.broadcast %cst_6 : f32 to vector<16x128xf32>
    %10 = arith.mulf %9, %8 : vector<16x128xf32>
    %cst_7 = arith.constant 4.471500e-02 : f32
    %11 = vector.broadcast %cst_7 : f32 to vector<16x128xf32>
    %12 = arith.mulf %11, %8 : vector<16x128xf32>
    %13 = arith.mulf %12, %8 : vector<16x128xf32>
    %14 = arith.mulf %13, %8 : vector<16x128xf32>
    %15 = arith.addf %8, %14 : vector<16x128xf32>
    %cst_8 = arith.constant 0.797884583 : f32
    %16 = vector.broadcast %cst_8 : f32 to vector<16x128xf32>
    %17 = arith.mulf %16, %15 : vector<16x128xf32>
    %18 = math.tanh %17 : vector<16x128xf32>
    %cst_9 = arith.constant 1.000000e+00 : f32
    %19 = vector.broadcast %cst_9 : f32 to vector<16x128xf32>
    %20 = arith.addf %19, %18 : vector<16x128xf32>
    %21 = arith.mulf %10, %20 : vector<16x128xf32>
    %c0_10 = arith.constant 0 : index
    %c0_11 = arith.constant 0 : index
    %22 = vector.load %arg8[%c0_10, %c0_11] : memref<16x128xf32, #tpu.memory_space<vmem>>, vector<16x128xf32>
    %23 = arith.truncf %21 : vector<16x128xf32> to vector<16x128xbf16>
    %c0_12 = arith.constant 0 : index
    %c0_13 = arith.constant 0 : index
    %24 = vector.load %arg5[%c0_12, %c0_13] : memref<128x128xbf16, #tpu.memory_space<vmem>>, vector<128x128xbf16>
    %cst_14 = arith.constant dense<0.000000e+00> : vector<16x128xf32>
    %25 = tpu.matmul %23, %24, %cst_14 {dimension_numbers = #tpu.dot_dimension_numbers<[1], [0], [0], [1], [0, 0, 1, 1], [], []>} : vector<16x128xbf16>, vector<128x128xbf16>, vector<16x128xf32> -> vector<16x128xf32>
    %26 = arith.addf %22, %25 : vector<16x128xf32>
    %c0_15 = arith.constant 0 : index
    %c0_16 = arith.constant 0 : index
    %27 = vector.load %arg8[%c0_15, %c0_16] : memref<16x128xf32, #tpu.memory_space<vmem>>, vector<16x128xf32>
    tpu.vector_store %arg8[%c0_15, %c0_16], %26 {strides = array<i32>} : memref<16x128xf32, #tpu.memory_space<vmem>>, vector<16x128xf32>,
    %c0_i32_17 = arith.constant 0 : i32
    %28 = arith.cmpi eq, %arg1, %c0_i32_17 : i32
    %29 = arith.extui %28 : i1 to i32
    %c0_i32_18 = arith.constant 0 : i32
    %30 = arith.cmpi ne, %29, %c0_i32_18 : i32
    scf.if %30 {
      %c0_19 = arith.constant 0 : index
      %c0_20 = arith.constant 0 : index
      %31 = vector.load %arg8[%c0_19, %c0_20] : memref<16x128xf32, #tpu.memory_space<vmem>>, vector<16x128xf32>
      %c0_21 = arith.constant 0 : index
      %c0_22 = arith.constant 0 : index
      %32 = vector.load %arg7[%c0_21, %c0_22] : memref<16x128xf32, #tpu.memory_space<vmem>>, vector<16x128xf32>
      tpu.vector_store %arg7[%c0_21, %c0_22], %31 {strides = array<i32>} : memref<16x128xf32, #tpu.memory_space<vmem>>, vector<16x128xf32>,
    } else {
    }
    return
  }
  func.func @transform_0(%arg0: i32, %arg1: i32) -> (i32, i32) {
    %c0_i32 = arith.constant 0 : i32
    %c0_i32_0 = arith.constant 0 : i32
    return %arg0, %c0_i32 : i32, i32
  }
  func.func @transform_1(%arg0: i32, %arg1: i32) -> (i32, i32) {
    %c0_i32 = arith.constant 0 : i32
    %c0_i32_0 = arith.constant 0 : i32
    return %c0_i32, %arg1 : i32, i32
  }
  func.func @transform_2(%arg0: i32, %arg1: i32) -> (i32, i32) {
    %c0_i32 = arith.constant 0 : i32
    %c0_i32_0 = arith.constant 0 : i32
    return %c0_i32, %arg1 : i32, i32
  }
  func.func @transform_3(%arg0: i32, %arg1: i32) -> (i32, i32) {
    %c0_i32 = arith.constant 0 : i32
    %c0_i32_0 = arith.constant 0 : i32
    return %arg1, %c0_i32 : i32, i32
  }
  func.func @transform_4(%arg0: i32, %arg1: i32) -> (i32, i32) {
    %c0_i32 = arith.constant 0 : i32
    %c0_i32_0 = arith.constant 0 : i32
    %c0_i32_1 = arith.constant 0 : i32
    return %c0_i32, %c0_i32_0 : i32, i32
  }
  func.func @transform_5(%arg0: i32, %arg1: i32) -> (i32, i32) {
    %c0_i32 = arith.constant 0 : i32
    %c0_i32_0 = arith.constant 0 : i32
    return %arg0, %c0_i32 : i32, i32
  }
}

</mosaic_0001>

<llo_original>
// kernel: quantum_feedforward.1
$region0: #{quantum_feedforward.1}
  #allocation0 [shape = 'u32[]', space=smem, size = 0x4, offset = 0x4, fixed_abs, tag = 'smem constant byte address 0x4 - core index']
  #allocation1 [shape = 'u32[144,128]{1,0:T(1,128)}', space=vmem, size = 0x12000, scoped, tag = 'internal scratch']
  #allocation2 [shape = 'f32[16,128]{1,0:T(8,128)}', space=vmem, size = 0x2000, scoped, tag = 'scratch operand']
  %s0 = inlined_call_operand.vmem [shape: bf16[16,128], index: 0, kind: input, shape index: {}]
  %s1 = inlined_call_operand.vmem [shape: bf16[128,128], index: 1, kind: input, shape index: {}]
  %s2 = inlined_call_operand.vmem [shape: f32[1,128], index: 2, kind: input, shape index: {}]
  %s3 = inlined_call_operand.vmem [shape: bf16[128,128], index: 3, kind: input, shape index: {}]
  %s4 = inlined_call_operand.vmem [shape: f32[1,128], index: 4, kind: input, shape index: {}]
  %s5 = inlined_call_operand.vmem [shape: f32[16,128], index: 5, kind: output, shape index: {}]
  %s6 = sld [smem:[#allocation0]]
  $region38: #{quantum_feedforward.1} parent=0
    _
  %s8 = ssub.s32 1, %s6
  %s9 = scalar_select 0, %s8, %s6
  // Predicated region
  $region2: #{quantum_feedforward.1} parent=0 // pred_check
    _
  $region3: #{quantum_feedforward.1} parent=0 // pred_check_branch
    %11 = sbr.rel (0) target = $region5
  $region4: #{quantum_feedforward.1} parent=0 // pred_region
    _
  $region5: #{quantum_feedforward.1} parent=0 // pred_fallthru
    _
  // Predicated region
  $region6: #{quantum_feedforward.1} parent=0 // pred_check
    _
  $region7: #{quantum_feedforward.1} parent=0 // pred_check_branch
    %13 = sbr.rel (0) target = $region9
  $region8: #{quantum_feedforward.1} parent=0 // pred_region
    _
  $region9: #{quantum_feedforward.1} parent=0 // pred_fallthru
    _
  // Predicated region
  $region10: #{quantum_feedforward.1} parent=0 // pred_check
    _
  $region11: #{quantum_feedforward.1} parent=0 // pred_check_branch
    %15 = sbr.rel (0) target = $region13
  $region12: #{quantum_feedforward.1} parent=0 // pred_region
    _
  $region13: #{quantum_feedforward.1} parent=0 // pred_fallthru
    _
  // Predicated region
  $region14: #{quantum_feedforward.1} parent=0 // pred_check
    _
  $region15: #{quantum_feedforward.1} parent=0 // pred_check_branch
    %17 = sbr.rel (0) target = $region17
  $region16: #{quantum_feedforward.1} parent=0 // pred_region
    _
  $region17: #{quantum_feedforward.1} parent=0 // pred_fallthru
    _
  // Predicated region
  $region18: #{quantum_feedforward.1} parent=0 // pred_check
    _
  $region19: #{quantum_feedforward.1} parent=0 // pred_check_branch
    %19 = sbr.rel (0) target = $region21
  $region20: #{quantum_feedforward.1} parent=0 // pred_region
    _
  $region21: #{quantum_feedforward.1} parent=0 // pred_fallthru
    _
  %p21 = scmp.eq.s32.totalorder 0, 0
  // Predicated region
  $region22: #{quantum_feedforward.1} parent=0 // pred_check
    %p22 = pneg %p21
  $region23: #{quantum_feedforward.1} parent=0 // pred_check_branch
    %24 = sbr.rel (%p22) target = $region25
  $region24: #{quantum_feedforward.1} parent=0 // pred_region
    %v25 = vld [vmem:[%s4] sm:$0x1]
    %v27 = vlaneseq
    %v28 = vshrl.u32 %v27, 7
    %v29 = vsub.s32 0, %v28
    %v30 = vrot.slane %v25, %v29
    %32 = vst [vmem:[#allocation2] sm:$0xff] %v30
    %33 = vst [vmem:[#allocation2 + $0x8] sm:$0xff] %v30
  $region25: #{quantum_feedforward.1} parent=0 // pred_fallthru
    _
  %v34 = vld [vmem:[%s0] sm:$0xf]
  %v35 = vld [vmem:[%s0 + $0x4] sm:$0xf]
  %v36 = vld [vmem:[%s1] sm:$0xf]
  %v37 = vld [vmem:[%s1 + $0x4] sm:$0xf]
  %v38 = vld [vmem:[%s1 + $0x8] sm:$0xf]
  %v39 = vld [vmem:[%s1 + $0xc] sm:$0xf]
  %v40 = vld [vmem:[%s1 + $0x10] sm:$0xf]
  %v41 = vld [vmem:[%s1 + $0x14] sm:$0xf]
  %v42 = vld [vmem:[%s1 + $0x18] sm:$0xf]
  %v43 = vld [vmem:[%s1 + $0x1c] sm:$0xf]
  %v44 = vld [vmem:[%s1 + $0x20] sm:$0xf]
  %v45 = vld [vmem:[%s1 + $0x24] sm:$0xf]
  %v46 = vld [vmem:[%s1 + $0x28] sm:$0xf]
  %v47 = vld [vmem:[%s1 + $0x2c] sm:$0xf]
  %v48 = vld [vmem:[%s1 + $0x30] sm:$0xf]
  %v49 = vld [vmem:[%s1 + $0x34] sm:$0xf]
  %v50 = vld [vmem:[%s1 + $0x38] sm:$0xf]
  %v51 = vld [vmem:[%s1 + $0x3c] sm:$0xf]
  %v52 = vld [vmem:[%s2] sm:$0x1]
  %v54 = vlaneseq
  %v55 = vshrl.u32 %v54, 7
  %v56 = vsub.s32 0, %v55
  %v57 = vrot.slane %v52, %v56
  %v61 = vunpack.c.l.b16 %v34
  %v62 = vunpack.c.l.b16 %v35
  %v63 = vpack.c.b16 %v62, %v61
  %v81 = vunpack.c.l.b16 %v36
  %v82 = vunpack.c.l.b16 %v37
  %v83 = vunpack.c.l.b16 %v38
  %v84 = vunpack.c.l.b16 %v39
  %v85 = vunpack.c.l.b16 %v40
  %v86 = vunpack.c.l.b16 %v41
  %v87 = vunpack.c.l.b16 %v42
  %v88 = vunpack.c.l.b16 %v43
  %v89 = vunpack.c.l.b16 %v44
  %v90 = vunpack.c.l.b16 %v45
  %v91 = vunpack.c.l.b16 %v46
  %v92 = vunpack.c.l.b16 %v47
  %v93 = vunpack.c.l.b16 %v48
  %v94 = vunpack.c.l.b16 %v49
  %v95 = vunpack.c.l.b16 %v50
  %v96 = vunpack.c.l.b16 %v51
  %v97 = vpack.c.b16 %v82, %v81
  %v98 = vpack.c.b16 %v84, %v83
  %v99 = vpack.c.b16 %v86, %v85
  %v100 = vpack.c.b16 %v88, %v87
  %v101 = vpack.c.b16 %v90, %v89
  %v102 = vpack.c.b16 %v92, %v91
  %v103 = vpack.c.b16 %v94, %v93
  %v104 = vpack.c.b16 %v96, %v95
  %113 = vmatprep.subr.bf16.mxu0 0
  %114 = vmatpush1.bf16.msra.mxu0 %v104
  %115 = vmatprep.subr.bf16.mxu0 0
  %116 = vmatpush1.bf16.msra.mxu0 %v103
  %117 = vmatprep.subr.bf16.mxu0 0
  %118 = vmatpush1.bf16.msra.mxu0 %v102
  %119 = vmatprep.subr.bf16.mxu0 0
  %120 = vmatpush1.bf16.msra.mxu0 %v101
  %121 = vmatprep.subr.bf16.mxu0 0
  %122 = vmatpush1.bf16.msra.mxu0 %v100
  %123 = vmatprep.subr.bf16.mxu0 0
  %124 = vmatpush1.bf16.msra.mxu0 %v99
  %125 = vmatprep.subr.bf16.mxu0 0
  %126 = vmatpush1.bf16.msra.mxu0 %v98
  %127 = vmatprep.subr.bf16.mxu0 0
  %128 = vmatpush1.bf16.msra.mxu0 %v97
  %129 = vmatprep.subr.bf16.mxu0 0
  %130 = vmatpush2.bf16.msra.mxu0 0
  %131 = vmatprep.subr.bf16.mxu0 0
  %132 = vmatpush2.bf16.msra.mxu0 0
  %133 = vmatprep.subr.bf16.mxu0 0
  %134 = vmatpush2.bf16.msra.mxu0 0
  %135 = vmatprep.subr.bf16.mxu0 0
  %136 = vmatpush2.bf16.msra.mxu0 0
  %137 = vmatprep.subr.bf16.mxu0 0
  %138 = vmatpush2.bf16.msra.mxu0 0
  %139 = vmatprep.subr.bf16.mxu0 0
  %140 = vmatpush2.bf16.msra.mxu0 0
  %141 = vmatprep.subr.bf16.mxu0 0
  %142 = vmatpush2.bf16.msra.mxu0 0
  %143 = vmatprep.subr.bf16.mxu0 0
  %144 = vmatpush2.bf16.msra.mxu0 0
  %145 = vmatprep.mubr.bf16.mxu0 0
  %146 = vmatmul.mubr.bf16.gmra.mxu0 %v63
  %v147 = vpop.f32.mrf.mxu0
  %v148 = vadd.f32 %v57, %v147
  %v149 = vpop.f32.mrf.mxu0
  %v150 = vpop.f32.mrf.mxu0
  %v151 = vadd.f32 %v57, %v150
  %v152 = vpop.f32.mrf.mxu0
  %153 = vdwg.mxu0
  %v154 = vmul.f32 %v148, 0.5
  %v155 = vmul.f32 %v151, 0.5
  %v156 = vmul.f32 %v148, 0.044715
  %v157 = vmul.f32 %v151, 0.044715
  %v158 = vmul.f32 %v156, %v148
  %v159 = vmul.f32 %v157, %v151
  %v160 = vmul.f32 %v158, %v148
  %v161 = vmul.f32 %v159, %v151
  %v162 = vadd.f32 %v148, %v160
  %v163 = vadd.f32 %v151, %v161
  %v164 = vmul.f32 %v162, 0.7978846
  %v165 = vmul.f32 %v163, 0.7978846
  %v166 = vtanh.pop %v164
  %v167 = vtanh.pop %v165
  %v168 = vadd.f32 %v166, 1.0
  %v169 = vadd.f32 %v167, 1.0
  %v170 = vmul.f32 %v154, %v168
  %v171 = vmul.f32 %v155, %v169
  %v172 = vld [vmem:[#allocation2] sm:$0xff]
  %v173 = vld [vmem:[#allocation2 + $0x8] sm:$0xff]
  %v174 = vpack.c.bf16 %v171, %v170
  %v175 = vld [vmem:[%s3] sm:$0xf]
  %v176 = vld [vmem:[%s3 + $0x4] sm:$0xf]
  %v177 = vld [vmem:[%s3 + $0x8] sm:$0xf]
  %v178 = vld [vmem:[%s3 + $0xc] sm:$0xf]
  %v179 = vld [vmem:[%s3 + $0x10] sm:$0xf]
  %v180 = vld [vmem:[%s3 + $0x14] sm:$0xf]
  %v181 = vld [vmem:[%s3 + $0x18] sm:$0xf]
  %v182 = vld [vmem:[%s3 + $0x1c] sm:$0xf]
  %v183 = vld [vmem:[%s3 + $0x20] sm:$0xf]
  %v184 = vld [vmem:[%s3 + $0x24] sm:$0xf]
  %v185 = vld [vmem:[%s3 + $0x28] sm:$0xf]
  %v186 = vld [vmem:[%s3 + $0x2c] sm:$0xf]
  %v187 = vld [vmem:[%s3 + $0x30] sm:$0xf]
  %v188 = vld [vmem:[%s3 + $0x34] sm:$0xf]
  %v189 = vld [vmem:[%s3 + $0x38] sm:$0xf]
  %v190 = vld [vmem:[%s3 + $0x3c] sm:$0xf]
  %v207 = vunpack.c.l.b16 %v175
  %v208 = vunpack.c.l.b16 %v176
  %v209 = vunpack.c.l.b16 %v177
  %v210 = vunpack.c.l.b16 %v178
  %v211 = vunpack.c.l.b16 %v179
  %v212 = vunpack.c.l.b16 %v180
  %v213 = vunpack.c.l.b16 %v181
  %v214 = vunpack.c.l.b16 %v182
  %v215 = vunpack.c.l.b16 %v183
  %v216 = vunpack.c.l.b16 %v184
  %v217 = vunpack.c.l.b16 %v185
  %v218 = vunpack.c.l.b16 %v186
  %v219 = vunpack.c.l.b16 %v187
  %v220 = vunpack.c.l.b16 %v188
  %v221 = vunpack.c.l.b16 %v189
  %v222 = vunpack.c.l.b16 %v190
  %v223 = vpack.c.b16 %v208, %v207
  %v224 = vpack.c.b16 %v210, %v209
  %v225 = vpack.c.b16 %v212, %v211
  %v226 = vpack.c.b16 %v214, %v213
  %v227 = vpack.c.b16 %v216, %v215
  %v228 = vpack.c.b16 %v218, %v217
  %v229 = vpack.c.b16 %v220, %v219
  %v230 = vpack.c.b16 %v222, %v221
  %239 = vmatprep.subr.bf16.mxu0 0
  %240 = vmatpush1.bf16.msra.mxu0 %v230
  %241 = vmatprep.subr.bf16.mxu0 0
  %242 = vmatpush1.bf16.msra.mxu0 %v229
  %243 = vmatprep.subr.bf16.mxu0 0
  %244 = vmatpush1.bf16.msra.mxu0 %v228
  %245 = vmatprep.subr.bf16.mxu0 0
  %246 = vmatpush1.bf16.msra.mxu0 %v227
  %247 = vmatprep.subr.bf16.mxu0 0
  %248 = vmatpush1.bf16.msra.mxu0 %v226
  %249 = vmatprep.subr.bf16.mxu0 0
  %250 = vmatpush1.bf16.msra.mxu0 %v225
  %251 = vmatprep.subr.bf16.mxu0 0
  %252 = vmatpush1.bf16.msra.mxu0 %v224
  %253 = vmatprep.subr.bf16.mxu0 0
  %254 = vmatpush1.bf16.msra.mxu0 %v223
  %255 = vmatprep.subr.bf16.mxu0 0
  %256 = vmatpush2.bf16.msra.mxu0 0
  %257 = vmatprep.subr.bf16.mxu0 0
  %258 = vmatpush2.bf16.msra.mxu0 0
  %259 = vmatprep.subr.bf16.mxu0 0
  %260 = vmatpush2.bf16.msra.mxu0 0
  %261 = vmatprep.subr.bf16.mxu0 0
  %262 = vmatpush2.bf16.msra.mxu0 0
  %263 = vmatprep.subr.bf16.mxu0 0
  %264 = vmatpush2.bf16.msra.mxu0 0
  %265 = vmatprep.subr.bf16.mxu0 0
  %266 = vmatpush2.bf16.msra.mxu0 0
  %267 = vmatprep.subr.bf16.mxu0 0
  %268 = vmatpush2.bf16.msra.mxu0 0
  %269 = vmatprep.subr.bf16.mxu0 0
  %270 = vmatpush2.bf16.msra.mxu0 0
  %271 = vmatprep.mubr.bf16.mxu0 0
  %272 = vmatmul.mubr.bf16.gmra.mxu0 %v174
  %v273 = vpop.f32.mrf.mxu0
  %v274 = vadd.f32 0.0, %v273
  %v275 = vpop.f32.mrf.mxu0
  %v276 = vpop.f32.mrf.mxu0
  %v277 = vadd.f32 0.0, %v276
  %v278 = vpop.f32.mrf.mxu0
  %279 = vdwg.mxu0
  %v280 = vadd.f32 %v172, %v274
  %v281 = vadd.f32 %v173, %v277
  %282 = vst [vmem:[#allocation2] sm:$0xff] %v280
  %283 = vst [vmem:[#allocation2 + $0x8] sm:$0xff] %v281
  // Predicated region
  $region26: #{quantum_feedforward.1} parent=0 // pred_check
    %p284 = pneg %p21
  $region27: #{quantum_feedforward.1} parent=0 // pred_check_branch
    %286 = sbr.rel (%p284) target = $region29
  $region28: #{quantum_feedforward.1} parent=0 // pred_region
    %v287 = vld [vmem:[#allocation2] sm:$0xff]
    %v288 = vld [vmem:[#allocation2 + $0x8] sm:$0xff]
    %289 = vst [vmem:[%s5] sm:$0xff] %v287
    %290 = vst [vmem:[%s5 + $0x8] sm:$0xff] %v288
  $region29: #{quantum_feedforward.1} parent=0 // pred_fallthru
    _
  // Predicated region
  $region30: #{quantum_feedforward.1} parent=0 // pred_check
    _
  $region31: #{quantum_feedforward.1} parent=0 // pred_check_branch
    %292 = sbr.rel (0) target = $region33
  $region32: #{quantum_feedforward.1} parent=0 // pred_region
    _
  $region33: #{quantum_feedforward.1} parent=0 // pred_fallthru
    _
  // Predicated region
  $region34: #{quantum_feedforward.1} parent=0 // pred_check
    _
  $region35: #{quantum_feedforward.1} parent=0 // pred_check_branch
    %294 = sbr.rel (0) target = $region37
  $region36: #{quantum_feedforward.1} parent=0 // pred_region
    _
  $region37: #{quantum_feedforward.1} parent=0 // pred_fallthru
    _

</llo_original>
